<compile_context>
chip_gen: v7x
topology: tpu7x:2x2x1
jax: 0.10.0
libtpu: 0.0.40
codegen_flags: <defaults>
</compile_context>

<pallas_src>
import functools

import jax
import jax.numpy as jnp
from jax.experimental import pallas as pl
from jax.experimental.pallas import tpu as pltpu


def _round_up(a, b):
    return (a + b - 1) // b * b


def _scl_tile_kernel(ref_ref, pos_ref, neg_ref, zpos_ref, esum_ref, *,
                     inv_t, eps, n_valid, tile, masked, reduce_axis):
    """One tile: per-row sim_pos/T and shifted exp-sum partials.

    Layouts:
      reduce_axis == 0: blocks are (D, TILE)  (N on the lane axis, small D)
      reduce_axis == 1: blocks are (TILE, D)  (D on the lane axis, large D)
    """
    a = ref_ref[...].astype(jnp.float32)
    p = pos_ref[...].astype(jnp.float32)
    g = neg_ref[...].astype(jnp.float32)

    def rsum(x):
        return jnp.sum(x, axis=reduce_axis, keepdims=True)

    # TODO(synk): for very large D (>=512), these reductions could be moved to
    # the (otherwise idle) MXU via a ones-vector matmul if the XLU ever binds.
    a_sq = rsum(a * a)
    p_sq = rsum(p * p)
    g_sq = rsum(g * g)
    dot_p = rsum(a * p)
    dot_g = rsum(a * g)

    eps2 = eps * eps
    # cos(a,b)/T with 1/T folded into the rsqrt factor (EUP).
    z_pos = dot_p * (inv_t * jax.lax.rsqrt(jnp.maximum(a_sq * p_sq, eps2)))
    z_neg = dot_g * (inv_t * jax.lax.rsqrt(jnp.maximum(a_sq * g_sq, eps2)))

    if masked:
        # Ragged edge block: zero padded rows *before* the exp so no NaN/Inf
        # from garbage lanes is ever produced.
        row_axis = 1 - reduce_axis
        idx = (pl.program_id(0) * tile
               + jax.lax.broadcasted_iota(jnp.int32, z_pos.shape, row_axis))
        valid = idx < n_valid
        z_pos = jnp.where(valid, z_pos, 0.0)
        z_neg = jnp.where(valid, z_neg, 0.0)

    # cos <= 1  =>  z <= 1/T, so exp(z - 1/T) <= 1 (never overflows).
    e_sum = jnp.exp(z_pos - inv_t) + jnp.exp(z_neg - inv_t)
    if masked:
        e_sum = jnp.where(valid, e_sum, 0.0)

    zpos_ref[...] = z_pos
    esum_ref[...] = e_sum


def supervised_contrastive_loss(feature_ref, features_pos, features_neg,
                                temperature, *, eps=1e-8, block_rows=None):
    """Pallas TPU implementation of SupervisedContrastiveLoss.forward."""
    assert feature_ref.shape == features_pos.shape == features_neg.shape
    assert feature_ref.ndim == 2
    n, d = feature_ref.shape
    inv_t = 1.0 / float(temperature)

    # Small feature dims: put N on the 128-wide lane axis (transposed layout).
    transposed = d < 128
    if transposed:
        ops = (feature_ref.T, features_pos.T, features_neg.T)     # (D, N)
        reduce_axis = 0
        quantum = 128                 # lane-axis tiles: multiples of 128
        d_pad = _round_up(d, 8)       # sublane padding of the feature axis
    else:
        ops = (feature_ref, features_pos, features_neg)           # (N, D)
        reduce_axis = 1
        quantum = 16                  # sublane-axis tile quantum (f32/bf16 safe)
        d_pad = _round_up(d, 128)     # lane padding of the feature axis

    # Generation-aware VMEM budget (v5e/v6e: 128 MiB, v7x: 64 MiB physical).
    try:
        vmem_cap = int(getattr(pltpu.get_tpu_info(), "vmem_capacity_bytes", 0))
    except Exception:
        vmem_cap = 0
    if vmem_cap <= 0:
        vmem_cap = 64 << 20
    vmem_limit = min(vmem_cap * 3 // 4, 100 << 20)

    # Per-row VMEM cost: 3 DMA'd operands (double-buffered) + ~2x f32 working
    # copies (upcasts / products); keep the estimate under half the limit.
    itemsize = max(x.dtype.itemsize for x in ops)
    per_row = 2 * 3 * d_pad * itemsize + 2 * 3 * d_pad * 4
    tile_cap = (vmem_limit // 2) // max(per_row, 1)
    tile_cap = max(quantum, tile_cap // quantum * quantum)

    if block_rows is not None:
        tile = max(quantum, _round_up(int(block_rows), quantum))
    else:
        tile = tile_cap
    if tile >= n:
        tile = n                      # single full block: no ragged edge/mask
    grid_n = pl.cdiv(n, tile)
    masked = (n % tile) != 0

    if transposed:
        in_spec = pl.BlockSpec((d, tile), lambda i: (0, i))
        out_spec = pl.BlockSpec((1, tile), lambda i: (0, i))
        out_shape = (1, n)
    else:
        in_spec = pl.BlockSpec((tile, d), lambda i: (i, 0))
        out_spec = pl.BlockSpec((tile, 1), lambda i: (i, 0))
        out_shape = (n, 1)

    kernel = functools.partial(
        _scl_tile_kernel, inv_t=inv_t, eps=float(eps), n_valid=n,
        tile=tile, masked=masked, reduce_axis=reduce_axis)

    z_pos, e_sum = pl.pallas_call(
        kernel,
        out_shape=(jax.ShapeDtypeStruct(out_shape, jnp.float32),
                   jax.ShapeDtypeStruct(out_shape, jnp.float32)),
        grid=(grid_n,),
        in_specs=[in_spec, in_spec, in_spec],
        out_specs=(out_spec, out_spec),
        compiler_params=pltpu.CompilerParams(
            dimension_semantics=("parallel",),      # tiles are independent
            vmem_limit_bytes=vmem_limit),
    )(*ops)

    # Tiny O(N) finalize in plain JAX: loss = log(denom) - mean(sim_pos/T),
    # with the constant 1/T shift re-added exactly.
    return (inv_t + jnp.log(jnp.sum(e_sum))) - jnp.sum(z_pos) / n


def _reference_loss(feature_ref, features_pos, features_neg, temperature,
                    eps=1e-8):
    """Plain-JAX reference mirroring the PyTorch module exactly."""
    def cos(a, b):
        num = jnp.sum(a * b, axis=1)
        den = jnp.maximum(jnp.linalg.norm(a, axis=1) *
                          jnp.linalg.norm(b, axis=1), eps)
        return num / den

    exp_neg = jnp.exp(cos(feature_ref, features_neg) / temperature)
    exp_pos = jnp.exp(cos(feature_ref, features_pos) / temperature)
    log_probs = jnp.log(exp_pos) - jnp.log(jnp.sum(exp_neg) + jnp.sum(exp_pos))
    return jnp.mean(-log_probs)


if __name__ == "__main__":
    temperature = 0.07
    root = jax.random.PRNGKey(0)

    def check(n, d, salt, **kw):
        ks = jax.random.split(jax.random.fold_in(root, salt), 3)
        fr = jax.random.normal(ks[0], (n, d), dtype=jnp.float32)
        fp = jax.random.normal(ks[1], (n, d), dtype=jnp.float32)
        fn = jax.random.normal(ks[2], (n, d), dtype=jnp.float32)
        got = jax.block_until_ready(
            supervised_contrastive_loss(fr, fp, fn, temperature, **kw))
        ref = _reference_loss(fr, fp, fn, temperature)
        assert jnp.allclose(got, ref, rtol=1e-5, atol=1e-5), (n, d, got, ref)

    # Small shape matching the module's expectation (batch=8, dim=32):
    # transposed (N-on-lane) layout, single full block.
    check(8, 32, salt=0)
    # Transposed layout, multiple lane tiles with a ragged edge + row mask.
    check(300, 32, salt=1, block_rows=128)
    # Row layout (D >= 128), multiple sublane tiles with a ragged edge + mask.
    check(20, 256, salt=2, block_rows=8)

    print("KERNEL_OK")
</pallas_src>

<mosaic_0001>
module attributes {stable_mosaic.version = 11 : i64} {
  func.func @_scl_tile_kernel(%arg0: i32, %arg1: memref<32x8xf32, #tpu.memory_space<vmem>>, %arg2: memref<32x8xf32, #tpu.memory_space<vmem>>, %arg3: memref<32x8xf32, #tpu.memory_space<vmem>>, %arg4: memref<1x8xf32, #tpu.memory_space<vmem>>, %arg5: memref<1x8xf32, #tpu.memory_space<vmem>>) attributes {dimension_semantics = [#tpu.dimension_semantics<parallel>], iteration_bounds = array<i64: 1>, scalar_prefetch = 0 : i64, scratch_operands = 0 : i64, tpu.core_type = #tpu.core_type<tc>, window_params = [{transform_indices = @transform_0, window_bounds = array<i64: 32, 8>}, {transform_indices = @transform_1, window_bounds = array<i64: 32, 8>}, {transform_indices = @transform_2, window_bounds = array<i64: 32, 8>}, {transform_indices = @transform_3, window_bounds = array<i64: 1, 8>}, {transform_indices = @transform_4, window_bounds = array<i64: 1, 8>}]} {
    %c0 = arith.constant 0 : index
    %c0_0 = arith.constant 0 : index
    %0 = vector.load %arg1[%c0, %c0_0] : memref<32x8xf32, #tpu.memory_space<vmem>>, vector<32x8xf32>
    %c0_1 = arith.constant 0 : index
    %c0_2 = arith.constant 0 : index
    %1 = vector.load %arg2[%c0_1, %c0_2] : memref<32x8xf32, #tpu.memory_space<vmem>>, vector<32x8xf32>
    %c0_3 = arith.constant 0 : index
    %c0_4 = arith.constant 0 : index
    %2 = vector.load %arg3[%c0_3, %c0_4] : memref<32x8xf32, #tpu.memory_space<vmem>>, vector<32x8xf32>
    %3 = arith.mulf %0, %0 : vector<32x8xf32>
    %cst = arith.constant dense<0.000000e+00> : vector<8xf32>
    %4 = vector.multi_reduction <add>, %3, %cst [0] : vector<32x8xf32> to vector<8xf32>
    %5 = vector.shape_cast %4 : vector<8xf32> to vector<1x8xf32>
    %6 = arith.mulf %1, %1 : vector<32x8xf32>
    %cst_5 = arith.constant dense<0.000000e+00> : vector<8xf32>
    %7 = vector.multi_reduction <add>, %6, %cst_5 [0] : vector<32x8xf32> to vector<8xf32>
    %8 = vector.shape_cast %7 : vector<8xf32> to vector<1x8xf32>
    %9 = arith.mulf %2, %2 : vector<32x8xf32>
    %cst_6 = arith.constant dense<0.000000e+00> : vector<8xf32>
    %10 = vector.multi_reduction <add>, %9, %cst_6 [0] : vector<32x8xf32> to vector<8xf32>
    %11 = vector.shape_cast %10 : vector<8xf32> to vector<1x8xf32>
    %12 = arith.mulf %0, %1 : vector<32x8xf32>
    %cst_7 = arith.constant dense<0.000000e+00> : vector<8xf32>
    %13 = vector.multi_reduction <add>, %12, %cst_7 [0] : vector<32x8xf32> to vector<8xf32>
    %14 = vector.shape_cast %13 : vector<8xf32> to vector<1x8xf32>
    %15 = arith.mulf %0, %2 : vector<32x8xf32>
    %cst_8 = arith.constant dense<0.000000e+00> : vector<8xf32>
    %16 = vector.multi_reduction <add>, %15, %cst_8 [0] : vector<32x8xf32> to vector<8xf32>
    %17 = vector.shape_cast %16 : vector<8xf32> to vector<1x8xf32>
    %18 = arith.mulf %5, %8 : vector<1x8xf32>
    %cst_9 = arith.constant 1.000000e-16 : f32
    %19 = vector.broadcast %cst_9 : f32 to vector<1x8xf32>
    %20 = arith.maximumf %18, %19 : vector<1x8xf32>
    %21 = math.rsqrt %20 : vector<1x8xf32>
    %cst_10 = arith.constant 14.2857141 : f32
    %22 = vector.broadcast %cst_10 : f32 to vector<1x8xf32>
    %23 = arith.mulf %22, %21 : vector<1x8xf32>
    %24 = arith.mulf %14, %23 : vector<1x8xf32>
    %25 = arith.mulf %5, %11 : vector<1x8xf32>
    %cst_11 = arith.constant 1.000000e-16 : f32
    %26 = vector.broadcast %cst_11 : f32 to vector<1x8xf32>
    %27 = arith.maximumf %25, %26 : vector<1x8xf32>
    %28 = math.rsqrt %27 : vector<1x8xf32>
    %cst_12 = arith.constant 14.2857141 : f32
    %29 = vector.broadcast %cst_12 : f32 to vector<1x8xf32>
    %30 = arith.mulf %29, %28 : vector<1x8xf32>
    %31 = arith.mulf %17, %30 : vector<1x8xf32>
    %cst_13 = arith.constant 14.2857141 : f32
    %32 = vector.broadcast %cst_13 : f32 to vector<1x8xf32>
    %33 = arith.subf %24, %32 : vector<1x8xf32>
    %34 = math.exp %33 : vector<1x8xf32>
    %cst_14 = arith.constant 14.2857141 : f32
    %35 = vector.broadcast %cst_14 : f32 to vector<1x8xf32>
    %36 = arith.subf %31, %35 : vector<1x8xf32>
    %37 = math.exp %36 : vector<1x8xf32>
    %38 = arith.addf %34, %37 : vector<1x8xf32>
    %c0_15 = arith.constant 0 : index
    %c0_16 = arith.constant 0 : index
    %39 = vector.load %arg4[%c0_15, %c0_16] : memref<1x8xf32, #tpu.memory_space<vmem>>, vector<1x8xf32>
    tpu.vector_store %arg4[%c0_15, %c0_16], %24 {strides = array<i32>} : memref<1x8xf32, #tpu.memory_space<vmem>>, vector<1x8xf32>,
    %c0_17 = arith.constant 0 : index
    %c0_18 = arith.constant 0 : index
    %40 = vector.load %arg5[%c0_17, %c0_18] : memref<1x8xf32, #tpu.memory_space<vmem>>, vector<1x8xf32>
    tpu.vector_store %arg5[%c0_17, %c0_18], %38 {strides = array<i32>} : memref<1x8xf32, #tpu.memory_space<vmem>>, vector<1x8xf32>,
    return
  }
  func.func @transform_0(%arg0: i32) -> (i32, i32) {
    %c0_i32 = arith.constant 0 : i32
    %c0_i32_0 = arith.constant 0 : i32
    return %c0_i32, %arg0 : i32, i32
  }
  func.func @transform_1(%arg0: i32) -> (i32, i32) {
    %c0_i32 = arith.constant 0 : i32
    %c0_i32_0 = arith.constant 0 : i32
    return %c0_i32, %arg0 : i32, i32
  }
  func.func @transform_2(%arg0: i32) -> (i32, i32) {
    %c0_i32 = arith.constant 0 : i32
    %c0_i32_0 = arith.constant 0 : i32
    return %c0_i32, %arg0 : i32, i32
  }
  func.func @transform_3(%arg0: i32) -> (i32, i32) {
    %c0_i32 = arith.constant 0 : i32
    %c0_i32_0 = arith.constant 0 : i32
    return %c0_i32, %arg0 : i32, i32
  }
  func.func @transform_4(%arg0: i32) -> (i32, i32) {
    %c0_i32 = arith.constant 0 : i32
    %c0_i32_0 = arith.constant 0 : i32
    return %c0_i32, %arg0 : i32, i32
  }
}

</mosaic_0001>

<llo_original>
// kernel: tpu_custom_call.1
$region0: #{tpu_custom_call.1}
  #allocation0 [shape = 'u32[]', space=smem, size = 0x4, offset = 0x4, fixed_abs, tag = 'smem constant byte address 0x4 - core index']
  #allocation1 [shape = 'u32[144,128]{1,0:T(1,128)}', space=vmem, size = 0x12000, scoped, tag = 'internal scratch']
  %s0 = inlined_call_operand.vmem [shape: f32[32,8], index: 0, kind: input, shape index: {}]
  %s1 = inlined_call_operand.vmem [shape: f32[32,8], index: 1, kind: input, shape index: {}]
  %s2 = inlined_call_operand.vmem [shape: f32[32,8], index: 2, kind: input, shape index: {}]
  %s3 = inlined_call_operand.hbm [shape: f32[1,8], index: 3, kind: output, shape index: {0}]
  %s4 = inlined_call_operand.hbm [shape: f32[1,8], index: 4, kind: output, shape index: {1}]
  %5 = xla_tuple %s3, %s4
  %s6 = sld [smem:[#allocation0]]
  $region30: #{tpu_custom_call.1} parent=0
    _
  %s8 = ssub.s32 1, %s6
  %s9 = scalar_select 0, %s8, %s6
  $region1: #{tpu_custom_call.1} parent=0
    #allocation2 [shape = 'u8[512]{0}', space=vmem, size = 0x400, scoped, tag = 'output window, operand 0, single buffered']
    #allocation3 [shape = 's32[1]{0}', space=sflag, size = 0x4, scoped, tag = 'scoped memory for tpu_custom_call.1']
    #allocation4 [shape = 'u8[512]{0}', space=vmem, size = 0x400, scoped, tag = 'output window, operand 1, single buffered']
    #allocation5 [shape = 's32[1]{0}', space=sflag, size = 0x4, scoped, tag = 'scoped memory for tpu_custom_call.1']
    %10 = vsyncpa [#allocation3], 0
    %11 = vsyncpa [#allocation5], 0
    // Predicated region
    $region2: #{tpu_custom_call.1} parent=1 // pred_check
      _
    $region3: #{tpu_custom_call.1} parent=1 // pred_check_branch
      %13 = sbr.rel (0) target = $region5
    $region4: #{tpu_custom_call.1} parent=1 // pred_region
      _
    $region5: #{tpu_custom_call.1} parent=1 // pred_fallthru
      _
    // Predicated region
    $region6: #{tpu_custom_call.1} parent=1 // pred_check
      _
    $region7: #{tpu_custom_call.1} parent=1 // pred_check_branch
      %15 = sbr.rel (0) target = $region9
    $region8: #{tpu_custom_call.1} parent=1 // pred_region
      _
    $region9: #{tpu_custom_call.1} parent=1 // pred_fallthru
      _
    // Predicated region
    $region10: #{tpu_custom_call.1} parent=1 // pred_check
      _
    $region11: #{tpu_custom_call.1} parent=1 // pred_check_branch
      %17 = sbr.rel (0) target = $region13
    $region12: #{tpu_custom_call.1} parent=1 // pred_region
      _
    $region13: #{tpu_custom_call.1} parent=1 // pred_fallthru
      _
    %v18 = vld [vmem:[%s0] sm:$0xff]
    %v19 = vld [vmem:[%s0 + $0x8] sm:$0xff]
    %v20 = vld [vmem:[%s0 + $0x10] sm:$0xff]
    %v21 = vld [vmem:[%s0 + $0x18] sm:$0xff]
    %v22 = vld [vmem:[%s1] sm:$0xff]
    %v23 = vld [vmem:[%s1 + $0x8] sm:$0xff]
    %v24 = vld [vmem:[%s1 + $0x10] sm:$0xff]
    %v25 = vld [vmem:[%s1 + $0x18] sm:$0xff]
    %v26 = vld [vmem:[%s2] sm:$0xff]
    %v27 = vld [vmem:[%s2 + $0x8] sm:$0xff]
    %v28 = vld [vmem:[%s2 + $0x10] sm:$0xff]
    %v29 = vld [vmem:[%s2 + $0x18] sm:$0xff]
    %v30 = vmul.f32 %v18, %v18
    %v31 = vmul.f32 %v19, %v19
    %v32 = vmul.f32 %v20, %v20
    %v33 = vmul.f32 %v21, %v21
    %vm34 = vcmask 64512
    %v35 = vsel %vm34, %v30, 0.0
    %v36 = vsel %vm34, %v31, 0.0
    %v37 = vadd.f32 %v35, %v36
    %v38 = vsel %vm34, %v32, 0.0
    %v39 = vadd.f32 %v37, %v38
    %v40 = vsel %vm34, %v33, 0.0
    %v41 = vadd.f32 %v39, %v40
    %v42 = vrot.slane %v41, 4
    %v43 = vadd.f32 %v41, %v42
    %v44 = vrot.slane %v43, 2
    %v45 = vadd.f32 %v43, %v44
    %v46 = vrot.slane %v45, 1
    %v47 = vadd.f32 %v45, %v46
    %v48 = vmul.f32 %v22, %v22
    %v49 = vmul.f32 %v23, %v23
    %v50 = vmul.f32 %v24, %v24
    %v51 = vmul.f32 %v25, %v25
    %v52 = vsel %vm34, %v48, 0.0
    %v53 = vsel %vm34, %v49, 0.0
    %v54 = vadd.f32 %v52, %v53
    %v55 = vsel %vm34, %v50, 0.0
    %v56 = vadd.f32 %v54, %v55
    %v57 = vsel %vm34, %v51, 0.0
    %v58 = vadd.f32 %v56, %v57
    %v59 = vrot.slane %v58, 4
    %v60 = vadd.f32 %v58, %v59
    %v61 = vrot.slane %v60, 2
    %v62 = vadd.f32 %v60, %v61
    %v63 = vrot.slane %v62, 1
    %v64 = vadd.f32 %v62, %v63
    %v65 = vmul.f32 %v26, %v26
    %v66 = vmul.f32 %v27, %v27
    %v67 = vmul.f32 %v28, %v28
    %v68 = vmul.f32 %v29, %v29
    %v69 = vsel %vm34, %v65, 0.0
    %v70 = vsel %vm34, %v66, 0.0
    %v71 = vadd.f32 %v69, %v70
    %v72 = vsel %vm34, %v67, 0.0
    %v73 = vadd.f32 %v71, %v72
    %v74 = vsel %vm34, %v68, 0.0
    %v75 = vadd.f32 %v73, %v74
    %v76 = vrot.slane %v75, 4
    %v77 = vadd.f32 %v75, %v76
    %v78 = vrot.slane %v77, 2
    %v79 = vadd.f32 %v77, %v78
    %v80 = vrot.slane %v79, 1
    %v81 = vadd.f32 %v79, %v80
    %v82 = vmul.f32 %v18, %v22
    %v83 = vmul.f32 %v19, %v23
    %v84 = vmul.f32 %v20, %v24
    %v85 = vmul.f32 %v21, %v25
    %v86 = vsel %vm34, %v82, 0.0
    %v87 = vsel %vm34, %v83, 0.0
    %v88 = vadd.f32 %v86, %v87
    %v89 = vsel %vm34, %v84, 0.0
    %v90 = vadd.f32 %v88, %v89
    %v91 = vsel %vm34, %v85, 0.0
    %v92 = vadd.f32 %v90, %v91
    %v93 = vrot.slane %v92, 4
    %v94 = vadd.f32 %v92, %v93
    %v95 = vrot.slane %v94, 2
    %v96 = vadd.f32 %v94, %v95
    %v97 = vrot.slane %v96, 1
    %v98 = vadd.f32 %v96, %v97
    %v99 = vmul.f32 %v18, %v26
    %v100 = vmul.f32 %v19, %v27
    %v101 = vmul.f32 %v20, %v28
    %v102 = vmul.f32 %v21, %v29
    %v103 = vsel %vm34, %v99, 0.0
    %v104 = vsel %vm34, %v100, 0.0
    %v105 = vadd.f32 %v103, %v104
    %v106 = vsel %vm34, %v101, 0.0
    %v107 = vadd.f32 %v105, %v106
    %v108 = vsel %vm34, %v102, 0.0
    %v109 = vadd.f32 %v107, %v108
    %v110 = vrot.slane %v109, 4
    %v111 = vadd.f32 %v109, %v110
    %v112 = vrot.slane %v111, 2
    %v113 = vadd.f32 %v111, %v112
    %v114 = vrot.slane %v113, 1
    %v115 = vadd.f32 %v113, %v114
    %v116 = vmul.f32 %v47, %v64
    %v117 = vmax.f32 %v116, 1e-16
    %v118 = vrsqrt.pop %v117
    %v119 = vmul.f32 %v118, 14.285714
    %v120 = vmul.f32 %v98, %v119
    %v121 = vmul.f32 %v47, %v81
    %v122 = vmax.f32 %v121, 1e-16
    %v123 = vrsqrt.pop %v122
    %v124 = vmul.f32 %v123, 14.285714
    %v125 = vmul.f32 %v115, %v124
    %v126 = vsub.f32 %v120, 14.285714
    %v127 = vmul.f32 %v126, 1.442695
    %v128 = vpow.pop %v127
    %v129 = vsub.f32 %v125, 14.285714
    %v130 = vmul.f32 %v129, 1.442695
    %v131 = vpow.pop %v130
    %v132 = vadd.f32 %v128, %v131
    %vm133 = vcmask 57344
    %134 = vst.msk [vmem:[#allocation2] sm:$0x1] %vm133, %v120
    %135 = vst.msk [vmem:[#allocation4] sm:$0x1] %vm133, %v132
    // Predicated region
    $region14: #{tpu_custom_call.1} parent=1 // pred_check
      _
    $region15: #{tpu_custom_call.1} parent=1 // pred_check_branch
      %137 = sbr.rel (0) target = $region17
    $region16: #{tpu_custom_call.1} parent=1 // pred_region
      %s139 = ssub.s32 16, 16
      %140 = vsyncadd [#allocation3], %s139
      %s142 = sshll.u32 [#allocation2], 4
      %s143 = int_to_ptr.vmem [resolvable:$true] %s142
      %145 = dma.vmem_to_hbm [thread:$0]  %s143, 16, %s3, [#allocation3]
    $region17: #{tpu_custom_call.1} parent=1 // pred_fallthru
      _
    // Predicated region
    $region18: #{tpu_custom_call.1} parent=1 // pred_check
      _
    $region19: #{tpu_custom_call.1} parent=1 // pred_check_branch
      %147 = sbr.rel (0) target = $region21
    $region20: #{tpu_custom_call.1} parent=1 // pred_region
      %s149 = ssub.s32 16, 16
      %150 = vsyncadd [#allocation5], %s149
      %s152 = sshll.u32 [#allocation4], 4
      %s153 = int_to_ptr.vmem [resolvable:$true] %s152
      %155 = dma.vmem_to_hbm [thread:$0]  %s153, 16, %s4, [#allocation5]
    $region21: #{tpu_custom_call.1} parent=1 // pred_fallthru
      _
    // Predicated region
    $region22: #{tpu_custom_call.1} parent=1 // pred_check
      _
    $region23: #{tpu_custom_call.1} parent=1 // pred_check_branch
      %157 = sbr.rel (0) target = $region25
    $region24: #{tpu_custom_call.1} parent=1 // pred_region
      %158 = dma.done [#allocation3], 16
    $region25: #{tpu_custom_call.1} parent=1 // pred_fallthru
      _
    // Predicated region
    $region26: #{tpu_custom_call.1} parent=1 // pred_check
      _
    $region27: #{tpu_custom_call.1} parent=1 // pred_check_branch
      %160 = sbr.rel (0) target = $region29
    $region28: #{tpu_custom_call.1} parent=1 // pred_region
      %161 = dma.done [#allocation5], 16
    $region29: #{tpu_custom_call.1} parent=1 // pred_fallthru
      _
    %162 = vsyncpa [#allocation3], 1
    %163 = vsyncpa [#allocation5], 1

</llo_original>
